<compile_context>
chip_gen: v7x
topology: tpu7x:2x2x1
jax: 0.10.0
libtpu: 0.0.40
codegen_flags: <defaults>
</compile_context>

<pallas_src>
import functools
import math

import jax
import jax.numpy as jnp
from jax import lax
from jax.experimental import pallas as pl
from jax.experimental.pallas import tpu as pltpu


def _round_up(x, m):
    return ((x + m - 1) // m) * m


def _largest_tile(total, multiple, preferred):
    """Largest divisor of `total` that is a multiple of `multiple`, <= preferred."""
    t = min(total, preferred)
    t -= t % multiple
    while t >= multiple:
        if total % t == 0:
            return t
        t -= multiple
    return multiple


def _vmem_capacity_bytes():
    """Physical VMEM per TensorCore; conservative fallback if not queryable."""
    try:
        info = pltpu.get_tpu_info()
        cap = getattr(info, "vmem_capacity_bytes", None)
        if cap:
            return int(cap)
    except Exception:
        pass
    return 64 * 1024 * 1024  # v7x per-TC VMEM (smallest of the three generations)


# --------------------------------------------------------------------------- #
# Projection kernel: out = (x @ W + b) * scale, f32 accumulation on the MXU.
# --------------------------------------------------------------------------- #
def _proj_kernel(x_ref, w_ref, b_ref, o_ref, *, scale):
    acc = jnp.dot(x_ref[...], w_ref[...], preferred_element_type=jnp.float32)
    acc = acc + b_ref[...]
    if scale != 1.0:
        acc = acc * scale
    o_ref[...] = acc.astype(o_ref.dtype)


def _project(x2d, w, b, *, scale, out_dtype, row_tile, a_tile, vmem_limit):
    rows, hp = x2d.shape
    ap = w.shape[1]
    grid = (rows // row_tile, ap // a_tile)

    flops = 2 * rows * hp * ap
    bytes_accessed = (rows * hp * x2d.dtype.itemsize
                      + hp * ap * w.dtype.itemsize
                      + ap * 4
                      + rows * ap * jnp.dtype(out_dtype).itemsize)

    return pl.pallas_call(
        functools.partial(_proj_kernel, scale=scale),
        out_shape=jax.ShapeDtypeStruct((rows, ap), out_dtype),
        grid_spec=pltpu.PrefetchScalarGridSpec(
            num_scalar_prefetch=0,
            grid=grid,
            in_specs=[
                pl.BlockSpec((row_tile, hp), lambda r, a: (r, 0)),   # x rows
                pl.BlockSpec((hp, a_tile), lambda r, a: (0, a)),     # W columns
                pl.BlockSpec((1, a_tile), lambda r, a: (0, a)),      # bias
            ],
            out_specs=pl.BlockSpec((row_tile, a_tile), lambda r, a: (r, a)),
        ),
        compiler_params=pltpu.CompilerParams(
            dimension_semantics=("parallel", "parallel"),
            vmem_limit_bytes=vmem_limit),
        cost_estimate=pl.CostEstimate(flops=int(flops), transcendentals=0,
                                      bytes_accessed=int(bytes_accessed)),
    )(x2d, w, b)


# --------------------------------------------------------------------------- #
# Flash-style attention kernel over pre-projected (and pre-scaled) Q, K, V.
# --------------------------------------------------------------------------- #
def _make_flash_kernel(mask_needed):
    def kernel(*args):
        if mask_needed:
            q_ref, k_ref, v_ref, bias_ref, o_ref, m_scr, l_scr, acc_scr = args
        else:
            q_ref, k_ref, v_ref, o_ref, m_scr, l_scr, acc_scr = args
            bias_ref = None

        kv = pl.program_id(2)

        @pl.when(kv == 0)
        def _():
            m_scr[...] = jnp.full(m_scr.shape, -jnp.inf, m_scr.dtype)
            l_scr[...] = jnp.zeros_like(l_scr)
            acc_scr[...] = jnp.zeros_like(acc_scr)

        # Scores: contract the attention dim of both operands directly (no k.T).
        s = lax.dot_general(
            q_ref[...], k_ref[...],
            dimension_numbers=(((2,), (2,)), ((0,), (0,))),
            preferred_element_type=jnp.float32)               # (bb, tq, tk)

        if mask_needed:
            # Precomputed additive key bias: 0 for valid keys, -1e30 for padded.
            # exp(-1e30 - m) underflows to 0, so padded / fully-masked tiles
            # cannot corrupt l / acc (no NaNs, no exp(0)=1 hazard).
            s = s + bias_ref[...]

        m_prev = m_scr[...]
        m_new = jnp.maximum(m_prev, jnp.max(s, axis=-1, keepdims=True))
        alpha = jnp.exp(m_prev - m_new)
        p = jnp.exp(s - m_new)
        l_scr[...] = alpha * l_scr[...] + jnp.sum(p, axis=-1, keepdims=True)
        acc_scr[...] = alpha * acc_scr[...] + lax.dot_general(
            p.astype(v_ref.dtype), v_ref[...],
            dimension_numbers=(((2,), (1,)), ((0,), (0,))),
            preferred_element_type=jnp.float32)
        m_scr[...] = m_new

        @pl.when(kv == pl.num_programs(2) - 1)
        def _():
            inv_l = pl.reciprocal(l_scr[...], approx=True)    # EUP slot
            o_ref[...] = (acc_scr[...] * inv_l).astype(o_ref.dtype)

    return kernel


# --------------------------------------------------------------------------- #
# Wrapper
# --------------------------------------------------------------------------- #
def attention_layer(query, key, value, params, *,
                    block_b=None, block_q=256, block_k=256):
    """Pallas attention layer.

    query: (B, Lq, H); key/value: (B, Lk, H)
    params: wq/wk/wv of shape (H, A) (pre-transposed), bq/bk/bv of shape (A,)
    returns: (B, Lq, A)
    """
    B, Lq, H = query.shape
    _, Lk, _ = key.shape
    A = params["wq"].shape[1]

    dtype = query.dtype
    # bf16 MXU operands with f32 accumulation (native rate on v5e/v6e/v7x).
    compute_dtype = jnp.bfloat16 if jnp.issubdtype(dtype, jnp.floating) else dtype
    sublane = 16 if compute_dtype == jnp.bfloat16 else 8
    cdt_size = jnp.dtype(compute_dtype).itemsize
    out_size = jnp.dtype(dtype).itemsize

    scale = 1.0 / math.sqrt(float(A))   # uses the *original* attention_dim

    # Lane-dense feature dims; sublane-friendly sequence tiles.
    Hp = _round_up(H, 128)
    Ap = _round_up(A, 128)
    block_q = _round_up(block_q, sublane)
    block_k = _round_up(block_k, 128)   # keeps the (1, Lk_pad) mask block legal
    tq = min(block_q, _round_up(Lq, sublane))
    tk = min(block_k, _round_up(Lk, sublane))

    # ---- Generation-aware VMEM budget ------------------------------------- #
    phys_vmem = _vmem_capacity_bytes()
    vmem_limit = min((phys_vmem * 3) // 4, 96 * 1024 * 1024)
    budget = int(0.7 * vmem_limit)

    def flash_vmem_bytes(bb_, tq_, tk_):
        tiles_in = bb_ * (tq_ + 2 * tk_) * Ap * cdt_size      # q + k + v blocks
        tile_out = bb_ * tq_ * Ap * out_size
        scratch = bb_ * tq_ * Ap * 4 + 2 * bb_ * tq_ * 128 * 4  # acc + m/l
        mask = 2 * 8 * max(tk_, 128) * 4
        return 2 * tiles_in + 2 * tile_out + scratch + mask

    # >= 2 parallel batch steps when possible (feeds both v7x TensorCores).
    bb = max(1, B // 2) if block_b is None else max(1, min(block_b, B))
    while B % bb:
        bb -= 1
    while bb > 1 and flash_vmem_bytes(bb, tq, tk) > budget:
        bb -= 1
        while B % bb:
            bb -= 1
    while flash_vmem_bytes(bb, tq, tk) > budget and tk > 128:
        tk = max(128, _round_up(tk // 2, 128))
    while flash_vmem_bytes(bb, tq, tk) > budget and tq > sublane:
        tq = max(sublane, _round_up(tq // 2, sublane))

    # If batch gives only one grid step, try to expose >= 2 query steps so both
    # v7x TensorCores have work along the parallel q axis.
    if B // bb == 1:
        tq = min(tq, max(sublane, _round_up(-(-Lq // 2), sublane)))

    Lq_p = _round_up(Lq, tq)
    Lk_p = _round_up(Lk, tk)
    mask_needed = Lk_p != Lk

    # ---- Pad + cast host-side (XLA ops outside the kernels) ---------------- #
    def pad_to(x, shape):
        pads = [(0, s - d) for s, d in zip(shape, x.shape)]
        return jnp.pad(x, pads) if any(p[1] for p in pads) else x

    qx = pad_to(query.astype(compute_dtype), (B, Lq_p, Hp)).reshape(B * Lq_p, Hp)
    kx = pad_to(key.astype(compute_dtype), (B, Lk_p, Hp)).reshape(B * Lk_p, Hp)
    vx = pad_to(value.astype(compute_dtype), (B, Lk_p, Hp)).reshape(B * Lk_p, Hp)
    wq = pad_to(params["wq"].astype(compute_dtype), (Hp, Ap))
    wk = pad_to(params["wk"].astype(compute_dtype), (Hp, Ap))
    wv = pad_to(params["wv"].astype(compute_dtype), (Hp, Ap))
    bq = pad_to(params["bq"].astype(jnp.float32).reshape(1, A), (1, Ap))
    bk = pad_to(params["bk"].astype(jnp.float32).reshape(1, A), (1, Ap))
    bv = pad_to(params["bv"].astype(jnp.float32).reshape(1, A), (1, Ap))

    # ---- Pre-project Q (scale folded in), K, V once ------------------------ #
    ta = _largest_tile(Ap, 128, 512)
    tr_q = _largest_tile(B * Lq_p, sublane, 512)
    tr_k = _largest_tile(B * Lk_p, sublane, 512)

    qp = _project(qx, wq, bq, scale=scale, out_dtype=compute_dtype,
                  row_tile=tr_q, a_tile=ta, vmem_limit=vmem_limit)
    kp = _project(kx, wk, bk, scale=1.0, out_dtype=compute_dtype,
                  row_tile=tr_k, a_tile=ta, vmem_limit=vmem_limit)
    vp = _project(vx, wv, bv, scale=1.0, out_dtype=compute_dtype,
                  row_tile=tr_k, a_tile=ta, vmem_limit=vmem_limit)

    qp = qp.reshape(B, Lq_p, Ap)
    kp = kp.reshape(B, Lk_p, Ap)
    vp = vp.reshape(B, Lk_p, Ap)

    # ---- Flash attention over the projected tensors ------------------------ #
    grid = (B // bb, Lq_p // tq, Lk_p // tk)

    in_specs = [
        pl.BlockSpec((bb, tq, Ap), lambda b, q, k: (b, q, 0)),   # Q (scaled)
        pl.BlockSpec((bb, tk, Ap), lambda b, q, k: (b, k, 0)),   # K
        pl.BlockSpec((bb, tk, Ap), lambda b, q, k: (b, k, 0)),   # V
    ]
    operands = [qp, kp, vp]
    if mask_needed:
        col = jnp.arange(Lk_p)
        key_bias = jnp.where(col < Lk, 0.0, -1e30).astype(jnp.float32)
        operands.append(key_bias.reshape(1, Lk_p))
        in_specs.append(pl.BlockSpec((1, tk), lambda b, q, k: (0, k)))

    grid_spec = pltpu.PrefetchScalarGridSpec(
        num_scalar_prefetch=0,
        grid=grid,
        in_specs=in_specs,
        out_specs=pl.BlockSpec((bb, tq, Ap), lambda b, q, k: (b, q, 0)),
        scratch_shapes=[
            pltpu.VMEM((bb, tq, 1), jnp.float32),    # running max m
            pltpu.VMEM((bb, tq, 1), jnp.float32),    # running sum l
            pltpu.VMEM((bb, tq, Ap), jnp.float32),   # output accumulator
        ],
    )

    # Honest cost estimate: attention matmuls + per-q-tile K/V re-reads.
    nq = Lq_p // tq
    flops = 4 * B * Lq_p * Lk_p * Ap
    transcendentals = B * Lq_p * (Lk_p + (Lk_p // tk) + 1)
    bytes_accessed = (B * Lq_p * Ap * cdt_size
                      + 2 * nq * B * Lk_p * Ap * cdt_size
                      + B * Lq_p * Ap * out_size)
    cost = pl.CostEstimate(flops=int(flops),
                           transcendentals=int(transcendentals),
                           bytes_accessed=int(bytes_accessed))

    out = pl.pallas_call(
        _make_flash_kernel(mask_needed),
        out_shape=jax.ShapeDtypeStruct((B, Lq_p, Ap), dtype),
        grid_spec=grid_spec,
        compiler_params=pltpu.CompilerParams(
            dimension_semantics=("parallel", "parallel", "arbitrary"),
            vmem_limit_bytes=vmem_limit),
        cost_estimate=cost,
    )(*operands)

    return out[:, :Lq, :A]


def attention_layer_ref(query, key, value, params):
    """Plain-JAX reference mirroring the PyTorch forward."""
    q = jnp.einsum("blh,ha->bla", query, params["wq"]) + params["bq"]
    k = jnp.einsum("blh,ha->bla", key, params["wk"]) + params["bk"]
    v = jnp.einsum("blh,ha->bla", value, params["wv"]) + params["bv"]
    A = params["wq"].shape[1]
    scores = jnp.einsum("bqa,bka->bqk", q, k) / jnp.sqrt(jnp.float32(A))
    weights = jax.nn.softmax(scores, axis=-1)
    return jnp.einsum("bqk,bka->bqa", weights, v)


def init_params(key, hidden_dim, attention_dim):
    """Deterministic init matching nn.Linear shapes (weights pre-transposed)."""
    ks = jax.random.split(key, 6)
    bound = 1.0 / math.sqrt(hidden_dim)

    def lin(kw, kb):
        w = jax.random.uniform(kw, (hidden_dim, attention_dim),
                               jnp.float32, -bound, bound)
        b = jax.random.uniform(kb, (attention_dim,), jnp.float32, -bound, bound)
        return w, b

    wq, bq = lin(ks[0], ks[1])
    wk, bk = lin(ks[2], ks[3])
    wv, bv = lin(ks[4], ks[5])
    return {"wq": wq, "bq": bq, "wk": wk, "bk": bk, "wv": wv, "bv": bv}


if __name__ == "__main__":
    batch, len_q, len_k, hidden_dim = 2, 8, 8, 32
    attention_dim = hidden_dim  # default: attention_dim = hidden_dim

    root = jax.random.PRNGKey(0)
    k_params, k_q, k_k, k_v = jax.random.split(root, 4)

    params = init_params(k_params, hidden_dim, attention_dim)
    query = jax.random.normal(k_q, (batch, len_q, hidden_dim), jnp.float32)
    key = jax.random.normal(k_k, (batch, len_k, hidden_dim), jnp.float32)
    value = jax.random.normal(k_v, (batch, len_k, hidden_dim), jnp.float32)

    out = attention_layer(query, key, value, params)
    out = jax.block_until_ready(out)

    ref = attention_layer_ref(query, key, value, params)
    assert out.shape == (batch, len_q, attention_dim)
    # Tolerance covers bf16 MXU operands + approx (EUP) softmax reciprocal.
    max_err = float(jnp.max(jnp.abs(out.astype(jnp.float32) - ref)))
    assert max_err < 5e-2, f"mismatch vs reference: max abs err {max_err}"
    print("KERNEL_OK")
</pallas_src>

<mosaic_0001>
module attributes {stable_mosaic.version = 11 : i64} {
  func.func @_proj_kernel(%arg0: i32, %arg1: i32, %arg2: memref<32x128xbf16, #tpu.memory_space<vmem>>, %arg3: memref<128x128xbf16, #tpu.memory_space<vmem>>, %arg4: memref<1x128xf32, #tpu.memory_space<vmem>>, %arg5: memref<32x128xbf16, #tpu.memory_space<vmem>>) attributes {dimension_semantics = [#tpu.dimension_semantics<parallel>, #tpu.dimension_semantics<parallel>], iteration_bounds = array<i64: 1, 1>, scalar_prefetch = 0 : i64, scratch_operands = 0 : i64, tpu.core_type = #tpu.core_type<tc>, window_params = [{transform_indices = @transform_0, window_bounds = array<i64: 32, 128>}, {transform_indices = @transform_1, window_bounds = array<i64: 128, 128>}, {transform_indices = @transform_2, window_bounds = array<i64: 1, 128>}, {transform_indices = @transform_3, window_bounds = array<i64: 32, 128>}]} {
    %c0 = arith.constant 0 : index
    %c0_0 = arith.constant 0 : index
    %0 = vector.load %arg2[%c0, %c0_0] : memref<32x128xbf16, #tpu.memory_space<vmem>>, vector<32x128xbf16>
    %c0_1 = arith.constant 0 : index
    %c0_2 = arith.constant 0 : index
    %1 = vector.load %arg3[%c0_1, %c0_2] : memref<128x128xbf16, #tpu.memory_space<vmem>>, vector<128x128xbf16>
    %cst = arith.constant dense<0.000000e+00> : vector<32x128xf32>
    %2 = tpu.matmul %0, %1, %cst {dimension_numbers = #tpu.dot_dimension_numbers<[1], [0], [0], [1], [0, 0, 1, 1], [], []>} : vector<32x128xbf16>, vector<128x128xbf16>, vector<32x128xf32> -> vector<32x128xf32>
    %c0_3 = arith.constant 0 : index
    %c0_4 = arith.constant 0 : index
    %3 = vector.load %arg4[%c0_3, %c0_4] : memref<1x128xf32, #tpu.memory_space<vmem>>, vector<1x128xf32>
    %4 = vector.broadcast %3 : vector<1x128xf32> to vector<32x128xf32>
    %5 = arith.addf %2, %4 : vector<32x128xf32>
    %cst_5 = arith.constant 0.176776692 : f32
    %6 = vector.broadcast %cst_5 : f32 to vector<32x128xf32>
    %7 = arith.mulf %5, %6 : vector<32x128xf32>
    %8 = arith.truncf %7 : vector<32x128xf32> to vector<32x128xbf16>
    %c0_6 = arith.constant 0 : index
    %c0_7 = arith.constant 0 : index
    %9 = vector.load %arg5[%c0_6, %c0_7] : memref<32x128xbf16, #tpu.memory_space<vmem>>, vector<32x128xbf16>
    tpu.vector_store %arg5[%c0_6, %c0_7], %8 {strides = array<i32>} : memref<32x128xbf16, #tpu.memory_space<vmem>>, vector<32x128xbf16>,
    return
  }
  func.func @transform_0(%arg0: i32, %arg1: i32) -> (i32, i32) {
    %c0_i32 = arith.constant 0 : i32
    %c0_i32_0 = arith.constant 0 : i32
    return %arg0, %c0_i32 : i32, i32
  }
  func.func @transform_1(%arg0: i32, %arg1: i32) -> (i32, i32) {
    %c0_i32 = arith.constant 0 : i32
    %c0_i32_0 = arith.constant 0 : i32
    return %c0_i32, %arg1 : i32, i32
  }
  func.func @transform_2(%arg0: i32, %arg1: i32) -> (i32, i32) {
    %c0_i32 = arith.constant 0 : i32
    %c0_i32_0 = arith.constant 0 : i32
    return %c0_i32, %arg1 : i32, i32
  }
  func.func @transform_3(%arg0: i32, %arg1: i32) -> (i32, i32) {
    %c0_i32 = arith.constant 0 : i32
    return %arg0, %arg1 : i32, i32
  }
}

</mosaic_0001>

<llo_original>
// kernel: tpu_custom_call.1
$region0: #{tpu_custom_call.1}
  #allocation0 [shape = 'u32[]', space=smem, size = 0x4, offset = 0x4, fixed_abs, tag = 'smem constant byte address 0x4 - core index']
  #allocation1 [shape = 'u32[144,128]{1,0:T(1,128)}', space=vmem, size = 0x12000, scoped, tag = 'internal scratch']
  %s0 = inlined_call_operand.hbm [shape: bf16[32,128], index: 0, kind: input, shape index: {}]
  %s1 = inlined_call_operand.hbm [shape: bf16[128,128], index: 1, kind: input, shape index: {}]
  %s2 = inlined_call_operand.vmem [shape: f32[1,128], index: 2, kind: input, shape index: {}]
  %s3 = inlined_call_operand.hbm [shape: bf16[32,128], index: 3, kind: output, shape index: {}]
  %s4 = sld [smem:[#allocation0]]
  $region30: #{tpu_custom_call.1} parent=0
    _
  %s6 = ssub.s32 1, %s4
  %s7 = scalar_select 0, %s6, %s4
  $region1: #{tpu_custom_call.1} parent=0
    #allocation2 [shape = 'u8[8192]{0}', space=vmem, size = 0x2000, scoped, tag = 'input window, operand 0, single buffered']
    #allocation3 [shape = 's32[1]{0}', space=sflag, size = 0x4, scoped, tag = 'scoped memory for tpu_custom_call.1']
    #allocation4 [shape = 's32[1]{0}', space=sflag, size = 0x4, scoped, tag = 'scoped memory for tpu_custom_call.1']
    #allocation5 [shape = 'u8[32768]{0}', space=vmem, size = 0x8000, scoped, tag = 'input window, operand 1, single buffered']
    #allocation6 [shape = 's32[1]{0}', space=sflag, size = 0x4, scoped, tag = 'scoped memory for tpu_custom_call.1']
    #allocation7 [shape = 'u8[8192]{0}', space=vmem, size = 0x2000, scoped, tag = 'output window, operand 0, single buffered']
    %8 = vsyncpa [#allocation3], 0
    %9 = vsyncpa [#allocation6], 0
    %10 = vsyncpa [#allocation4], 0
    // Predicated region
    $region2: #{tpu_custom_call.1} parent=1 // pred_check
      _
    $region3: #{tpu_custom_call.1} parent=1 // pred_check_branch
      %12 = sbr.rel (0) target = $region5
    $region4: #{tpu_custom_call.1} parent=1 // pred_region
      %s14 = ssub.s32 256, 256
      %15 = vsyncadd [#allocation3], %s14
      %s16 = sshll.u32 [#allocation2], 4
      %s17 = int_to_ptr.vmem [resolvable:$true] %s16
      %22 = dma.hbm_to_vmem [thread:$0]  %s0, 256, %s17, [#allocation3], 64, 64, 4
    $region5: #{tpu_custom_call.1} parent=1 // pred_fallthru
      _
    // Predicated region
    $region6: #{tpu_custom_call.1} parent=1 // pred_check
      _
    $region7: #{tpu_custom_call.1} parent=1 // pred_check_branch
      %24 = sbr.rel (0) target = $region9
    $region8: #{tpu_custom_call.1} parent=1 // pred_region
      %s26 = ssub.s32 1024, 1024
      %27 = vsyncadd [#allocation6], %s26
      %s28 = sshll.u32 [#allocation5], 4
      %s29 = int_to_ptr.vmem [resolvable:$true] %s28
      %34 = dma.hbm_to_vmem [thread:$0]  %s1, 1024, %s29, [#allocation6], 64, 64, 4
    $region9: #{tpu_custom_call.1} parent=1 // pred_fallthru
      _
    // Predicated region
    $region10: #{tpu_custom_call.1} parent=1 // pred_check
      _
    $region11: #{tpu_custom_call.1} parent=1 // pred_check_branch
      %36 = sbr.rel (0) target = $region13
    $region12: #{tpu_custom_call.1} parent=1 // pred_region
      _
    $region13: #{tpu_custom_call.1} parent=1 // pred_fallthru
      _
    // Predicated region
    $region14: #{tpu_custom_call.1} parent=1 // pred_check
      _
    $region15: #{tpu_custom_call.1} parent=1 // pred_check_branch
      %38 = sbr.rel (0) target = $region17
    $region16: #{tpu_custom_call.1} parent=1 // pred_region
      %39 = dma.done [#allocation3], 256
    $region17: #{tpu_custom_call.1} parent=1 // pred_fallthru
      _
    // Predicated region
    $region18: #{tpu_custom_call.1} parent=1 // pred_check
      _
    $region19: #{tpu_custom_call.1} parent=1 // pred_check_branch
      %41 = sbr.rel (0) target = $region21
    $region20: #{tpu_custom_call.1} parent=1 // pred_region
      %42 = dma.done [#allocation6], 1024
    $region21: #{tpu_custom_call.1} parent=1 // pred_fallthru
      _
    %v44 = vld [vmem:[#allocation2] sm:$0xf]
    %v45 = vld [vmem:[#allocation2 + $0x4] sm:$0xf]
    %v46 = vld [vmem:[#allocation2 + $0x8] sm:$0xf]
    %v47 = vld [vmem:[#allocation2 + $0xc] sm:$0xf]
    %v48 = vld [vmem:[#allocation5] sm:$0xf]
    %v49 = vld [vmem:[#allocation5 + $0x4] sm:$0xf]
    %v50 = vld [vmem:[#allocation5 + $0x8] sm:$0xf]
    %v51 = vld [vmem:[#allocation5 + $0xc] sm:$0xf]
    %v52 = vld [vmem:[#allocation5 + $0x10] sm:$0xf]
    %v53 = vld [vmem:[#allocation5 + $0x14] sm:$0xf]
    %v54 = vld [vmem:[#allocation5 + $0x18] sm:$0xf]
    %v55 = vld [vmem:[#allocation5 + $0x1c] sm:$0xf]
    %v56 = vld [vmem:[#allocation5 + $0x20] sm:$0xf]
    %v57 = vld [vmem:[#allocation5 + $0x24] sm:$0xf]
    %v58 = vld [vmem:[#allocation5 + $0x28] sm:$0xf]
    %v59 = vld [vmem:[#allocation5 + $0x2c] sm:$0xf]
    %v60 = vld [vmem:[#allocation5 + $0x30] sm:$0xf]
    %v61 = vld [vmem:[#allocation5 + $0x34] sm:$0xf]
    %v62 = vld [vmem:[#allocation5 + $0x38] sm:$0xf]
    %v63 = vld [vmem:[#allocation5 + $0x3c] sm:$0xf]
    %v64 = vld [vmem:[%s2] sm:$0x1]
    %v66 = vlaneseq
    %v67 = vshrl.u32 %v66, 7
    %v68 = vsub.s32 0, %v67
    %v69 = vrot.slane %v64, %v68
    %v75 = vunpack.c.l.b16 %v44
    %v76 = vunpack.c.l.b16 %v45
    %v77 = vunpack.c.l.b16 %v46
    %v78 = vunpack.c.l.b16 %v47
    %v79 = vpack.c.b16 %v76, %v75
    %v80 = vpack.c.b16 %v78, %v77
    %v99 = vunpack.c.l.b16 %v48
    %v100 = vunpack.c.l.b16 %v49
    %v101 = vunpack.c.l.b16 %v50
    %v102 = vunpack.c.l.b16 %v51
    %v103 = vunpack.c.l.b16 %v52
    %v104 = vunpack.c.l.b16 %v53
    %v105 = vunpack.c.l.b16 %v54
    %v106 = vunpack.c.l.b16 %v55
    %v107 = vunpack.c.l.b16 %v56
    %v108 = vunpack.c.l.b16 %v57
    %v109 = vunpack.c.l.b16 %v58
    %v110 = vunpack.c.l.b16 %v59
    %v111 = vunpack.c.l.b16 %v60
    %v112 = vunpack.c.l.b16 %v61
    %v113 = vunpack.c.l.b16 %v62
    %v114 = vunpack.c.l.b16 %v63
    %v115 = vpack.c.b16 %v100, %v99
    %v116 = vpack.c.b16 %v102, %v101
    %v117 = vpack.c.b16 %v104, %v103
    %v118 = vpack.c.b16 %v106, %v105
    %v119 = vpack.c.b16 %v108, %v107
    %v120 = vpack.c.b16 %v110, %v109
    %v121 = vpack.c.b16 %v112, %v111
    %v122 = vpack.c.b16 %v114, %v113
    %131 = vmatprep.subr.bf16.mxu0 0
    %132 = vmatpush1.bf16.msra.mxu0 %v115
    %133 = vmatprep.subr.bf16.mxu0 0
    %134 = vmatpush1.bf16.msra.mxu0 %v116
    %135 = vmatprep.subr.bf16.mxu0 0
    %136 = vmatpush1.bf16.msra.mxu0 %v117
    %137 = vmatprep.subr.bf16.mxu0 0
    %138 = vmatpush1.bf16.msra.mxu0 %v118
    %139 = vmatprep.subr.bf16.mxu0 0
    %140 = vmatpush1.bf16.msra.mxu0 %v119
    %141 = vmatprep.subr.bf16.mxu0 0
    %142 = vmatpush1.bf16.msra.mxu0 %v120
    %143 = vmatprep.subr.bf16.mxu0 0
    %144 = vmatpush1.bf16.msra.mxu0 %v121
    %145 = vmatprep.subr.bf16.mxu0 0
    %146 = vmatpush1.bf16.msra.mxu0 %v122
    %147 = vmatprep.subr.bf16.mxu0 0
    %148 = vmatpush1.bf16.msra.mxu0 0
    %149 = vmatprep.subr.bf16.mxu0 0
    %150 = vmatpush1.bf16.msra.mxu0 0
    %151 = vmatprep.subr.bf16.mxu0 0
    %152 = vmatpush1.bf16.msra.mxu0 0
    %153 = vmatprep.subr.bf16.mxu0 0
    %154 = vmatpush1.bf16.msra.mxu0 0
    %155 = vmatprep.subr.bf16.mxu0 0
    %156 = vmatpush1.bf16.msra.mxu0 0
    %157 = vmatprep.subr.bf16.mxu0 0
    %158 = vmatpush1.bf16.msra.mxu0 0
    %159 = vmatprep.subr.bf16.mxu0 0
    %160 = vmatpush1.bf16.msra.mxu0 0
    %161 = vmatprep.subr.bf16.mxu0 0
    %162 = vmatpush1.bf16.msra.mxu0 0
    %163 = vmatprep.mubr.bf16.mxu0 0
    %164 = vmatmul.mubr.bf16.gmra.mrb[0].mxu0 %v79
    %v165 = vpop.f32.mrb[0].mxu0
    %v166 = vadd.f32 %v69, %v165
    %v167 = vpop.f32.mrb[0].mxu0
    %v168 = vpop.f32.mrb[0].mxu0
    %v169 = vadd.f32 %v69, %v168
    %v170 = vpop.f32.mrb[0].mxu0
    %171 = vmatprep.mubr.bf16.mxu0 0
    %172 = vmatmul.mubr.bf16.gmra.mrb[0].mxu0 %v80
    %v173 = vpop.f32.mrb[0].mxu0
    %v174 = vadd.f32 %v69, %v173
    %v175 = vpop.f32.mrb[0].mxu0
    %v176 = vpop.f32.mrb[0].mxu0
    %v177 = vadd.f32 %v69, %v176
    %v178 = vpop.f32.mrb[0].mxu0
    %179 = vdwg.mxu0
    %v180 = vmul.f32 %v166, 0.17677669
    %v181 = vmul.f32 %v169, 0.17677669
    %v182 = vmul.f32 %v174, 0.17677669
    %v183 = vmul.f32 %v177, 0.17677669
    %v184 = vpack.c.bf16 %v181, %v180
    %v185 = vpack.c.bf16 %v183, %v182
    %v188 = vunpack.c.l.b16 %v184
    %v189 = vunpack.c.h.b16 %v184
    %v190 = vunpack.c.l.b16 %v185
    %v191 = vunpack.c.h.b16 %v185
    %v192 = vpack.c.b16 %v188, %v188
    %v193 = vpack.c.b16 %v189, %v189
    %v194 = vpack.c.b16 %v190, %v190
    %v195 = vpack.c.b16 %v191, %v191
    %200 = vst [vmem:[#allocation7] sm:$0xf] %v192
    %201 = vst [vmem:[#allocation7 + $0x4] sm:$0xf] %v193
    %202 = vst [vmem:[#allocation7 + $0x8] sm:$0xf] %v194
    %203 = vst [vmem:[#allocation7 + $0xc] sm:$0xf] %v195
    // Predicated region
    $region22: #{tpu_custom_call.1} parent=1 // pred_check
      _
    $region23: #{tpu_custom_call.1} parent=1 // pred_check_branch
      %205 = sbr.rel (0) target = $region25
    $region24: #{tpu_custom_call.1} parent=1 // pred_region
      %s207 = ssub.s32 256, 256
      %208 = vsyncadd [#allocation4], %s207
      %s209 = sshll.u32 [#allocation7], 4
      %s210 = int_to_ptr.vmem [resolvable:$true] %s209
      %215 = dma.vmem_to_hbm [thread:$0]  %s210, 256, %s3, [#allocation4], 64, 64, 4
    $region25: #{tpu_custom_call.1} parent=1 // pred_fallthru
      _
    // Predicated region
    $region26: #{tpu_custom_call.1} parent=1 // pred_check
      _
    $region27: #{tpu_custom_call.1} parent=1 // pred_check_branch
      %217 = sbr.rel (0) target = $region29
    $region28: #{tpu_custom_call.1} parent=1 // pred_region
      %218 = dma.done [#allocation4], 256
    $region29: #{tpu_custom_call.1} parent=1 // pred_fallthru
      _
    %219 = vsyncpa [#allocation3], 1
    %220 = vsyncpa [#allocation6], 1
    %221 = vsyncpa [#allocation4], 1

</llo_original>
